<compile_context>
chip_gen: v5e
topology: v5e:2x2
jax: 0.10.0
libtpu: 0.0.40
codegen_flags: <defaults>
</compile_context>

<pallas_src>
import functools

import jax
import jax.numpy as jnp
from jax.experimental import pallas as pl
from jax.experimental.pallas import tpu as pltpu


def _resblock_kernel(x_ref, wm1_ref, b1_ref, wm2_ref, b2_ref, o_ref, *, P):
    # x_ref  : (nB, H, W*Cin)       f32  lane-dense packed input (batch block)
    # wm1_ref: (K*W*Cin, W*Cmid)    bf16 block-Toeplitz conv1 weights (kw + channel mix folded)
    # b1_ref : (1, W*Cmid)          f32  bias tiled along W
    # wm2_ref: (K*W*Cmid, W*Cout)   bf16
    # b2_ref : (1, W*Cout)          f32
    # o_ref  : (nB, H, W*Cout)      f32
    nB, H, _ = x_ref.shape
    x = x_ref[...]                             # (nB, H, W*Cin) f32, aligned full block
    xb = x.astype(jnp.bfloat16)                # cast ONCE before im2col (review item)

    def row_shift(a, dh):
        # y[:, h, :] = a[:, h + dh, :]; rows shifted in from outside the image are zero
        # (SAME padding in H).  Shift is per image (axis=1) -> no cross-image leakage.
        if dh == 0:
            return a
        z = jnp.zeros((a.shape[0], abs(dh), a.shape[2]), a.dtype)
        if dh > 0:
            return jnp.concatenate([a[:, dh:, :], z], axis=1)
        return jnp.concatenate([z, a[:, :dh, :]], axis=1)

    def im2col(a):
        # (nB, H, WC) bf16 -> (nB*H, K*WC) bf16 patch:
        # [a[h-P] | ... | a[h] | ... | a[h+P]] along lanes, then merge (nB, H) into rows.
        patch = jnp.concatenate(
            [row_shift(a, dh) for dh in range(-P, P + 1)], axis=2)
        return patch.reshape(nB * H, patch.shape[2])

    # ---- conv1 (single MXU dot, f32 accumulation) + bias + LeakyReLU(0.1)
    h1 = jnp.dot(im2col(xb), wm1_ref[...], preferred_element_type=jnp.float32)
    h1 = h1 + b1_ref[...]
    h1 = jnp.maximum(h1, 0.1 * h1)             # LeakyReLU, 2 VALU ops

    # ---- conv2 (single MXU dot) + bias
    h1b = h1.astype(jnp.bfloat16).reshape(nB, H, h1.shape[1])
    out = jnp.dot(im2col(h1b), wm2_ref[...], preferred_element_type=jnp.float32)
    out = out + b2_ref[...]

    # ---- identity residual add (f32), lane-dense unmasked store
    o_ref[...] = (out.reshape(nB, H, out.shape[1]) + x).astype(o_ref.dtype)


def _build_row_matrix(w_hwio, W):
    """Fold the horizontal (kw) taps + channel mixing of an HWIO conv kernel into a
    block-Toeplitz matrix acting on lane-packed rows.

    M[kh*W*Cin + w_in*Cin + ci, w_out*Cout + co] = w[kh, w_in - w_out + P, ci, co]
    (zero when the kw index falls outside the kernel => SAME padding in W).
    """
    K, _, Cin, Cout = w_hwio.shape
    P = (K - 1) // 2
    wi = jnp.arange(W)[:, None]                 # w_in
    wo = jnp.arange(W)[None, :]                 # w_out
    kw = wi - wo + P                            # (W, W)
    valid = (kw >= 0) & (kw < K)
    kw_c = jnp.clip(kw, 0, K - 1)
    m = w_hwio[:, kw_c, :, :]                   # (K, W_in, W_out, Cin, Cout)
    m = m * valid[None, :, :, None, None].astype(w_hwio.dtype)
    m = jnp.transpose(m, (0, 1, 3, 2, 4))       # (K, W_in, Cin, W_out, Cout)
    return m.reshape(K * W * Cin, W * Cout)


def _pick_batch_block(B, H):
    """Largest divisor of B whose block still fits comfortably in VMEM, targeting
    nB*H ~ 256 rows to fill the 256-row MXU (v6e/v7x; 128 on v5e)."""
    TARGET_ROWS = 256
    MAX_ROWS = 1024
    best = 1
    for nb in range(1, B + 1):
        if B % nb:
            continue
        if nb > 1 and nb * H > MAX_ROWS:
            break
        best = nb
        if nb * H >= TARGET_ROWS:
            break
    return best


def resblock_forward(x_nhwc, w1, b1, w2, b2, *, kernel_size=3, dilation=1,
                     batch_block=None):
    """x_nhwc: (B, H, W, Cin) float32. Weights in HWIO, biases (C,)."""
    assert dilation == 1, "only dilation=1 implemented"
    K = kernel_size
    P = (K + (K - 1) * (dilation - 1) - 1) // 2  # get_same_padding
    B, H, W, Cin = x_nhwc.shape
    Cmid = w1.shape[3]
    Cout = w2.shape[3]
    assert Cin == Cout, "identity residual requires inplanes == planes"

    nB = _pick_batch_block(B, H) if batch_block is None else batch_block
    assert B % nB == 0

    # Lane-dense packing: (B, H, W*C).  Free reshape (NHWC is contiguous in C-last order).
    x_p = x_nhwc.reshape(B, H, W * Cin)

    # Weights: fold kw + channel mixing into block-Toeplitz matrices, cast to bf16 for the MXU.
    wm1 = _build_row_matrix(w1, W).astype(jnp.bfloat16)     # (K*W*Cin,  W*Cmid)
    wm2 = _build_row_matrix(w2, W).astype(jnp.bfloat16)     # (K*W*Cmid, W*Cout)
    b1_p = jnp.tile(b1, W).reshape(1, W * Cmid)             # lane-dense bias (f32)
    b2_p = jnp.tile(b2, W).reshape(1, W * Cout)

    kernel = functools.partial(_resblock_kernel, P=P)

    def run(single_buffer_consts):
        def const_spec(shape):
            idx = lambda bi: (0,) * len(shape)
            if single_buffer_consts:
                # Constant index_map: fetched once, single VMEM buffer is enough.
                return pl.BlockSpec(shape, idx, pipeline_mode=pl.Buffered(1))
            return pl.BlockSpec(shape, idx)

        return pl.pallas_call(
            kernel,
            out_shape=jax.ShapeDtypeStruct((B, H, W * Cout), x_nhwc.dtype),
            grid_spec=pltpu.PrefetchScalarGridSpec(
                num_scalar_prefetch=0,
                grid=(B // nB,),
                in_specs=[
                    pl.BlockSpec((nB, H, W * Cin), lambda bi: (bi, 0, 0)),
                    const_spec((K * W * Cin, W * Cmid)),
                    const_spec((1, W * Cmid)),
                    const_spec((K * W * Cmid, W * Cout)),
                    const_spec((1, W * Cout)),
                ],
                out_specs=pl.BlockSpec((nB, H, W * Cout), lambda bi: (bi, 0, 0)),
            ),
            compiler_params=pltpu.CompilerParams(
                dimension_semantics=("parallel",)),
        )(x_p, wm1, b1_p, wm2, b2_p)

    try:
        out_p = run(True)
    except Exception:
        # pipeline_mode=pl.Buffered(1) unsupported in this Pallas build -> default buffering.
        out_p = run(False)

    return out_p.reshape(B, H, W, Cout)


def _reference(x_nhwc, w1, b1, w2, b2):
    """Pure-JAX f32 reference (NHWC / HWIO) for validation."""
    dn = jax.lax.conv_dimension_numbers(x_nhwc.shape, w1.shape,
                                        ("NHWC", "HWIO", "NHWC"))
    out = jax.lax.conv_general_dilated(x_nhwc, w1, (1, 1), "SAME",
                                       dimension_numbers=dn) + b1
    out = jnp.where(out >= 0, out, 0.1 * out)
    out = jax.lax.conv_general_dilated(out, w2, (1, 1), "SAME",
                                       dimension_numbers=dn) + b2
    return out + x_nhwc


if __name__ == "__main__":
    key = jax.random.PRNGKey(0)
    B, C, H, W = 2, 8, 16, 16   # inplanes == planes == 8; W*C = 128 (one full lane width)
    K = 3

    kx, k1, k2, kb1, kb2 = jax.random.split(key, 5)
    # Input in NCHW (PyTorch convention) then transposed to NHWC for the kernel.
    x_nchw = jax.random.normal(kx, (B, C, H, W), dtype=jnp.float32)
    x_nhwc = jnp.transpose(x_nchw, (0, 2, 3, 1))

    # Deterministic parameter init (PyTorch OIHW shape -> HWIO for the kernel).
    fan_in = C * K * K
    bound = 1.0 / jnp.sqrt(fan_in)
    w1_oihw = jax.random.uniform(k1, (C, C, K, K), jnp.float32, -bound, bound)
    w2_oihw = jax.random.uniform(k2, (C, C, K, K), jnp.float32, -bound, bound)
    b1 = jax.random.uniform(kb1, (C,), jnp.float32, -bound, bound)
    b2 = jax.random.uniform(kb2, (C,), jnp.float32, -bound, bound)
    w1_hwio = jnp.transpose(w1_oihw, (2, 3, 1, 0))
    w2_hwio = jnp.transpose(w2_oihw, (2, 3, 1, 0))

    ref = _reference(x_nhwc, w1_hwio, b1, w2_hwio, b2)

    # Main run: whole batch folded into one grid step (nB=2 -> M = nB*H = 32 MXU rows).
    out = resblock_forward(x_nhwc, w1_hwio, b1, w2_hwio, b2, kernel_size=K)
    out = jax.block_until_ready(out)
    assert out.shape == (B, H, W, C)
    max_err = float(jnp.max(jnp.abs(out - ref)))
    # bf16 MXU inputs (f32 accumulation) => loosened tolerance vs. the f32 reference.
    assert jnp.allclose(out, ref, atol=2e-2, rtol=2e-2), \
        f"mismatch vs reference (batched), max abs err = {max_err}"

    # Secondary check: per-image grid steps (grid=(B,), exercises multi-step pipelining and
    # the single-buffered constant operands across grid iterations).
    out1 = resblock_forward(x_nhwc, w1_hwio, b1, w2_hwio, b2, kernel_size=K,
                            batch_block=1)
    out1 = jax.block_until_ready(out1)
    max_err1 = float(jnp.max(jnp.abs(out1 - ref)))
    assert jnp.allclose(out1, ref, atol=2e-2, rtol=2e-2), \
        f"mismatch vs reference (per-image grid), max abs err = {max_err1}"

    print("KERNEL_OK")
</pallas_src>

<mosaic_0001>
module attributes {stable_mosaic.version = 11 : i64} {
  func.func @_resblock_kernel(%arg0: i32, %arg1: memref<2x16x128xf32, #tpu.memory_space<vmem>>, %arg2: memref<384x128xbf16, #tpu.memory_space<vmem>>, %arg3: memref<1x128xf32, #tpu.memory_space<vmem>>, %arg4: memref<384x128xbf16, #tpu.memory_space<vmem>>, %arg5: memref<1x128xf32, #tpu.memory_space<vmem>>, %arg6: memref<2x16x128xf32, #tpu.memory_space<vmem>>) attributes {dimension_semantics = [#tpu.dimension_semantics<parallel>], iteration_bounds = array<i64: 1>, scalar_prefetch = 0 : i64, scratch_operands = 0 : i64, tpu.core_type = #tpu.core_type<tc>, window_params = [{transform_indices = @transform_0, window_bounds = array<i64: 2, 16, 128>}, {pipeline_mode = #tpu.pipeline_mode<synchronous>, transform_indices = @transform_1, window_bounds = array<i64: 384, 128>}, {pipeline_mode = #tpu.pipeline_mode<synchronous>, transform_indices = @transform_2, window_bounds = array<i64: 1, 128>}, {pipeline_mode = #tpu.pipeline_mode<synchronous>, transform_indices = @transform_3, window_bounds = array<i64: 384, 128>}, {pipeline_mode = #tpu.pipeline_mode<synchronous>, transform_indices = @transform_4, window_bounds = array<i64: 1, 128>}, {transform_indices = @transform_5, window_bounds = array<i64: 2, 16, 128>}]} {
    %c0 = arith.constant 0 : index
    %c0_0 = arith.constant 0 : index
    %c0_1 = arith.constant 0 : index
    %0 = vector.load %arg1[%c0, %c0_0, %c0_1] : memref<2x16x128xf32, #tpu.memory_space<vmem>>, vector<2x16x128xf32>
    %1 = arith.truncf %0 : vector<2x16x128xf32> to vector<2x16x128xbf16>
    %cst = arith.constant 0.000000e+00 : bf16
    %2 = vector.broadcast %cst : bf16 to vector<2x1x128xbf16>
    %3 = vector.extract_strided_slice %1 {offsets = [0, 0, 0], sizes = [2, 15, 128], strides = [1, 1, 1]} : vector<2x16x128xbf16> to vector<2x15x128xbf16>
    %4 = tpu.concatenate %2, %3 in 1 : vector<2x1x128xbf16>, vector<2x15x128xbf16> -> vector<2x16x128xbf16>
    %cst_2 = arith.constant 0.000000e+00 : bf16
    %5 = vector.broadcast %cst_2 : bf16 to vector<2x1x128xbf16>
    %6 = vector.extract_strided_slice %1 {offsets = [0, 1, 0], sizes = [2, 15, 128], strides = [1, 1, 1]} : vector<2x16x128xbf16> to vector<2x15x128xbf16>
    %7 = tpu.concatenate %6, %5 in 1 : vector<2x15x128xbf16>, vector<2x1x128xbf16> -> vector<2x16x128xbf16>
    %8 = tpu.concatenate %4, %1, %7 in 2 : vector<2x16x128xbf16>, vector<2x16x128xbf16>, vector<2x16x128xbf16> -> vector<2x16x384xbf16>
    %9 = vector.shape_cast %8 : vector<2x16x384xbf16> to vector<32x384xbf16>
    %c0_3 = arith.constant 0 : index
    %c0_4 = arith.constant 0 : index
    %10 = vector.load %arg2[%c0_3, %c0_4] : memref<384x128xbf16, #tpu.memory_space<vmem>>, vector<384x128xbf16>
    %cst_5 = arith.constant dense<0.000000e+00> : vector<32x128xf32>
    %11 = tpu.matmul %9, %10, %cst_5 {dimension_numbers = #tpu.dot_dimension_numbers<[1], [0], [0], [1], [0, 0, 1, 1], [], []>} : vector<32x384xbf16>, vector<384x128xbf16>, vector<32x128xf32> -> vector<32x128xf32>
    %c0_6 = arith.constant 0 : index
    %c0_7 = arith.constant 0 : index
    %12 = vector.load %arg3[%c0_6, %c0_7] : memref<1x128xf32, #tpu.memory_space<vmem>>, vector<1x128xf32>
    %13 = vector.broadcast %12 : vector<1x128xf32> to vector<32x128xf32>
    %14 = arith.addf %11, %13 : vector<32x128xf32>
    %cst_8 = arith.constant 1.000000e-01 : f32
    %15 = vector.broadcast %cst_8 : f32 to vector<32x128xf32>
    %16 = arith.mulf %15, %14 : vector<32x128xf32>
    %17 = arith.maximumf %14, %16 : vector<32x128xf32>
    %18 = arith.truncf %17 : vector<32x128xf32> to vector<32x128xbf16>
    %19 = vector.shape_cast %18 : vector<32x128xbf16> to vector<2x16x128xbf16>
    %cst_9 = arith.constant 0.000000e+00 : bf16
    %20 = vector.broadcast %cst_9 : bf16 to vector<2x1x128xbf16>
    %21 = vector.extract_strided_slice %19 {offsets = [0, 0, 0], sizes = [2, 15, 128], strides = [1, 1, 1]} : vector<2x16x128xbf16> to vector<2x15x128xbf16>
    %22 = tpu.concatenate %20, %21 in 1 : vector<2x1x128xbf16>, vector<2x15x128xbf16> -> vector<2x16x128xbf16>
    %cst_10 = arith.constant 0.000000e+00 : bf16
    %23 = vector.broadcast %cst_10 : bf16 to vector<2x1x128xbf16>
    %24 = vector.extract_strided_slice %19 {offsets = [0, 1, 0], sizes = [2, 15, 128], strides = [1, 1, 1]} : vector<2x16x128xbf16> to vector<2x15x128xbf16>
    %25 = tpu.concatenate %24, %23 in 1 : vector<2x15x128xbf16>, vector<2x1x128xbf16> -> vector<2x16x128xbf16>
    %26 = tpu.concatenate %22, %19, %25 in 2 : vector<2x16x128xbf16>, vector<2x16x128xbf16>, vector<2x16x128xbf16> -> vector<2x16x384xbf16>
    %27 = vector.shape_cast %26 : vector<2x16x384xbf16> to vector<32x384xbf16>
    %c0_11 = arith.constant 0 : index
    %c0_12 = arith.constant 0 : index
    %28 = vector.load %arg4[%c0_11, %c0_12] : memref<384x128xbf16, #tpu.memory_space<vmem>>, vector<384x128xbf16>
    %cst_13 = arith.constant dense<0.000000e+00> : vector<32x128xf32>
    %29 = tpu.matmul %27, %28, %cst_13 {dimension_numbers = #tpu.dot_dimension_numbers<[1], [0], [0], [1], [0, 0, 1, 1], [], []>} : vector<32x384xbf16>, vector<384x128xbf16>, vector<32x128xf32> -> vector<32x128xf32>
    %c0_14 = arith.constant 0 : index
    %c0_15 = arith.constant 0 : index
    %30 = vector.load %arg5[%c0_14, %c0_15] : memref<1x128xf32, #tpu.memory_space<vmem>>, vector<1x128xf32>
    %31 = vector.broadcast %30 : vector<1x128xf32> to vector<32x128xf32>
    %32 = arith.addf %29, %31 : vector<32x128xf32>
    %33 = vector.shape_cast %32 : vector<32x128xf32> to vector<2x16x128xf32>
    %34 = arith.addf %33, %0 : vector<2x16x128xf32>
    %c0_16 = arith.constant 0 : index
    %c0_17 = arith.constant 0 : index
    %c0_18 = arith.constant 0 : index
    %35 = vector.load %arg6[%c0_16, %c0_17, %c0_18] : memref<2x16x128xf32, #tpu.memory_space<vmem>>, vector<2x16x128xf32>
    tpu.vector_store %arg6[%c0_16, %c0_17, %c0_18], %34 {strides = array<i32>} : memref<2x16x128xf32, #tpu.memory_space<vmem>>, vector<2x16x128xf32>,
    return
  }
  func.func @transform_0(%arg0: i32) -> (i32, i32, i32) {
    %c0_i32 = arith.constant 0 : i32
    %c0_i32_0 = arith.constant 0 : i32
    %c0_i32_1 = arith.constant 0 : i32
    return %arg0, %c0_i32, %c0_i32_0 : i32, i32, i32
  }
  func.func @transform_1(%arg0: i32) -> (i32, i32) {
    %c0_i32 = arith.constant 0 : i32
    %c0_i32_0 = arith.constant 0 : i32
    %c0_i32_1 = arith.constant 0 : i32
    return %c0_i32, %c0_i32_0 : i32, i32
  }
  func.func @transform_2(%arg0: i32) -> (i32, i32) {
    %c0_i32 = arith.constant 0 : i32
    %c0_i32_0 = arith.constant 0 : i32
    %c0_i32_1 = arith.constant 0 : i32
    return %c0_i32, %c0_i32_0 : i32, i32
  }
  func.func @transform_3(%arg0: i32) -> (i32, i32) {
    %c0_i32 = arith.constant 0 : i32
    %c0_i32_0 = arith.constant 0 : i32
    %c0_i32_1 = arith.constant 0 : i32
    return %c0_i32, %c0_i32_0 : i32, i32
  }
  func.func @transform_4(%arg0: i32) -> (i32, i32) {
    %c0_i32 = arith.constant 0 : i32
    %c0_i32_0 = arith.constant 0 : i32
    %c0_i32_1 = arith.constant 0 : i32
    return %c0_i32, %c0_i32_0 : i32, i32
  }
  func.func @transform_5(%arg0: i32) -> (i32, i32, i32) {
    %c0_i32 = arith.constant 0 : i32
    %c0_i32_0 = arith.constant 0 : i32
    %c0_i32_1 = arith.constant 0 : i32
    return %arg0, %c0_i32, %c0_i32_0 : i32, i32, i32
  }
}

module attributes {stable_mosaic.version = 11 : i64} {
  func.func @_resblock_kernel(%arg0: i32, %arg1: memref<2x16x128xf32, #tpu.memory_space<vmem>>, %arg2: memref<384x128xbf16, #tpu.memory_space<vmem>>, %arg3: memref<1x128xf32, #tpu.memory_space<vmem>>, %arg4: memref<384x128xbf16, #tpu.memory_space<vmem>>, %arg5: memref<1x128xf32, #tpu.memory_space<vmem>>, %arg6: memref<2x16x128xf32, #tpu.memory_space<vmem>>) attributes {dimension_semantics = [#tpu.dimension_semantics<parallel>], iteration_bounds = array<i64: 1>, scalar_prefetch = 0 : i64, scratch_operands = 0 : i64, tpu.core_type = #tpu.core_type<tc>, window_params = [{transform_indices = @transform_0, window_bounds = array<i64: 2, 16, 128>}, {pipeline_mode = #tpu.pipeline_mode<synchronous>, transform_indices = @transform_1, window_bounds = array<i64: 384, 128>}, {pipeline_mode = #tpu.pipeline_mode<synchronous>, transform_indices = @transform_2, window_bounds = array<i64: 1, 128>}, {pipeline_mode = #tpu.pipeline_mode<synchronous>, transform_indices = @transform_3, window_bounds = array<i64: 384, 128>}, {pipeline_mode = #tpu.pipeline_mode<synchronous>, transform_indices = @transform_4, window_bounds = array<i64: 1, 128>}, {transform_indices = @transform_5, window_bounds = array<i64: 2, 16, 128>}]} {
    %c0 = arith.constant 0 : index
    %c0_0 = arith.constant 0 : index
    %c0_1 = arith.constant 0 : index
    %0 = vector.load %arg1[%c0, %c0_0, %c0_1] : memref<2x16x128xf32, #tpu.memory_space<vmem>>, vector<2x16x128xf32>
    %1 = arith.truncf %0 : vector<2x16x128xf32> to vector<2x16x128xbf16>
    %cst = arith.constant 0.000000e+00 : bf16
    %2 = vector.broadcast %cst : bf16 to vector<2x1x128xbf16>
    %3 = vector.extract_strided_slice %1 {offsets = [0, 0, 0], sizes = [2, 15, 128], strides = [1, 1, 1]} : vector<2x16x128xbf16> to vector<2x15x128xbf16>
    %4 = tpu.concatenate %2, %3 in 1 : vector<2x1x128xbf16>, vector<2x15x128xbf16> -> vector<2x16x128xbf16>
    %cst_2 = arith.constant 0.000000e+00 : bf16
    %5 = vector.broadcast %cst_2 : bf16 to vector<2x1x128xbf16>
    %6 = vector.extract_strided_slice %1 {offsets = [0, 1, 0], sizes = [2, 15, 128], strides = [1, 1, 1]} : vector<2x16x128xbf16> to vector<2x15x128xbf16>
    %7 = tpu.concatenate %6, %5 in 1 : vector<2x15x128xbf16>, vector<2x1x128xbf16> -> vector<2x16x128xbf16>
    %8 = tpu.concatenate %4, %1, %7 in 2 : vector<2x16x128xbf16>, vector<2x16x128xbf16>, vector<2x16x128xbf16> -> vector<2x16x384xbf16>
    %9 = vector.shape_cast %8 : vector<2x16x384xbf16> to vector<32x384xbf16>
    %c0_3 = arith.constant 0 : index
    %c0_4 = arith.constant 0 : index
    %10 = vector.load %arg2[%c0_3, %c0_4] : memref<384x128xbf16, #tpu.memory_space<vmem>>, vector<384x128xbf16>
    %cst_5 = arith.constant dense<0.000000e+00> : vector<32x128xf32>
    %11 = tpu.matmul %9, %10, %cst_5 {dimension_numbers = #tpu.dot_dimension_numbers<[1], [0], [0], [1], [0, 0, 1, 1], [], []>} : vector<32x384xbf16>, vector<384x128xbf16>, vector<32x128xf32> -> vector<32x128xf32>
    %c0_6 = arith.constant 0 : index
    %c0_7 = arith.constant 0 : index
    %12 = vector.load %arg3[%c0_6, %c0_7] : memref<1x128xf32, #tpu.memory_space<vmem>>, vector<1x128xf32>
    %13 = vector.broadcast %12 : vector<1x128xf32> to vector<32x128xf32>
    %14 = arith.addf %11, %13 : vector<32x128xf32>
    %cst_8 = arith.constant 1.000000e-01 : f32
    %15 = vector.broadcast %cst_8 : f32 to vector<32x128xf32>
    %16 = arith.mulf %15, %14 : vector<32x128xf32>
    %17 = arith.maximumf %14, %16 : vector<32x128xf32>
    %18 = arith.truncf %17 : vector<32x128xf32> to vector<32x128xbf16>
    %19 = vector.shape_cast %18 : vector<32x128xbf16> to vector<2x16x128xbf16>
    %cst_9 = arith.constant 0.000000e+00 : bf16
    %20 = vector.broadcast %cst_9 : bf16 to vector<2x1x128xbf16>
    %21 = vector.extract_strided_slice %19 {offsets = [0, 0, 0], sizes = [2, 15, 128], strides = [1, 1, 1]} : vector<2x16x128xbf16> to vector<2x15x128xbf16>
    %22 = tpu.concatenate %20, %21 in 1 : vector<2x1x128xbf16>, vector<2x15x128xbf16> -> vector<2x16x128xbf16>
    %cst_10 = arith.constant 0.000000e+00 : bf16
    %23 = vector.broadcast %cst_10 : bf16 to vector<2x1x128xbf16>
    %24 = vector.extract_strided_slice %19 {offsets = [0, 1, 0], sizes = [2, 15, 128], strides = [1, 1, 1]} : vector<2x16x128xbf16> to vector<2x15x128xbf16>
    %25 = tpu.concatenate %24, %23 in 1 : vector<2x15x128xbf16>, vector<2x1x128xbf16> -> vector<2x16x128xbf16>
    %26 = tpu.concatenate %22, %19, %25 in 2 : vector<2x16x128xbf16>, vector<2x16x128xbf16>, vector<2x16x128xbf16> -> vector<2x16x384xbf16>
    %27 = vector.shape_cast %26 : vector<2x16x384xbf16> to vector<32x384xbf16>
    %c0_11 = arith.constant 0 : index
    %c0_12 = arith.constant 0 : index
    %28 = vector.load %arg4[%c0_11, %c0_12] : memref<384x128xbf16, #tpu.memory_space<vmem>>, vector<384x128xbf16>
    %cst_13 = arith.constant dense<0.000000e+00> : vector<32x128xf32>
    %29 = tpu.matmul %27, %28, %cst_13 {dimension_numbers = #tpu.dot_dimension_numbers<[1], [0], [0], [1], [0, 0, 1, 1], [], []>} : vector<32x384xbf16>, vector<384x128xbf16>, vector<32x128xf32> -> vector<32x128xf32>
    %c0_14 = arith.constant 0 : index
    %c0_15 = arith.constant 0 : index
    %30 = vector.load %arg5[%c0_14, %c0_15] : memref<1x128xf32, #tpu.memory_space<vmem>>, vector<1x128xf32>
    %31 = vector.broadcast %30 : vector<1x128xf32> to vector<32x128xf32>
    %32 = arith.addf %29, %31 : vector<32x128xf32>
    %33 = vector.shape_cast %32 : vector<32x128xf32> to vector<2x16x128xf32>
    %34 = arith.addf %33, %0 : vector<2x16x128xf32>
    %c0_16 = arith.constant 0 : index
    %c0_17 = arith.constant 0 : index
    %c0_18 = arith.constant 0 : index
    %35 = vector.load %arg6[%c0_16, %c0_17, %c0_18] : memref<2x16x128xf32, #tpu.memory_space<vmem>>, vector<2x16x128xf32>
    tpu.vector_store %arg6[%c0_16, %c0_17, %c0_18], %34 {strides = array<i32>} : memref<2x16x128xf32, #tpu.memory_space<vmem>>, vector<2x16x128xf32>,
    return
  }
  func.func @transform_0(%arg0: i32) -> (i32, i32, i32) {
    %c0_i32 = arith.constant 0 : i32
    %c0_i32_0 = arith.constant 0 : i32
    %c0_i32_1 = arith.constant 0 : i32
    return %arg0, %c0_i32, %c0_i32_0 : i32, i32, i32
  }
  func.func @transform_1(%arg0: i32) -> (i32, i32) {
    %c0_i32 = arith.constant 0 : i32
    %c0_i32_0 = arith.constant 0 : i32
    %c0_i32_1 = arith.constant 0 : i32
    return %c0_i32, %c0_i32_0 : i32, i32
  }
  func.func @transform_2(%arg0: i32) -> (i32, i32) {
    %c0_i32 = arith.constant 0 : i32
    %c0_i32_0 = arith.constant 0 : i32
    %c0_i32_1 = arith.constant 0 : i32
    return %c0_i32, %c0_i32_0 : i32, i32
  }
  func.func @transform_3(%arg0: i32) -> (i32, i32) {
    %c0_i32 = arith.constant 0 : i32
    %c0_i32_0 = arith.constant 0 : i32
    %c0_i32_1 = arith.constant 0 : i32
    return %c0_i32, %c0_i32_0 : i32, i32
  }
  func.func @transform_4(%arg0: i32) -> (i32, i32) {
    %c0_i32 = arith.constant 0 : i32
    %c0_i32_0 = arith.constant 0 : i32
    %c0_i32_1 = arith.constant 0 : i32
    return %c0_i32, %c0_i32_0 : i32, i32
  }
  func.func @transform_5(%arg0: i32) -> (i32, i32, i32) {
    %c0_i32 = arith.constant 0 : i32
    %c0_i32_0 = arith.constant 0 : i32
    %c0_i32_1 = arith.constant 0 : i32
    return %arg0, %c0_i32, %c0_i32_0 : i32, i32, i32
  }
}

</mosaic_0001>

<llo_original>
// kernel: tpu_custom_call.1
$region0: #{tpu_custom_call.1}
  #allocation0 [shape = 'u32[]', space=smem, size = 0x4, offset = 0x4, fixed_abs, tag = 'smem constant byte address 0x4 - core index']
  #allocation1 [shape = 'u32[72,128]{1,0:T(1,128)}', space=vmem, size = 0x9000, scoped, tag = 'internal scratch']
  %s0 = inlined_call_operand.hbm [shape: f32[2,16,128], index: 0, kind: input, shape index: {}]
  %s1 = inlined_call_operand.hbm [shape: bf16[384,128], index: 1, kind: input, shape index: {}]
  %s2 = inlined_call_operand.vmem [shape: f32[1,128], index: 2, kind: input, shape index: {}]
  %s3 = inlined_call_operand.hbm [shape: bf16[384,128], index: 3, kind: input, shape index: {}]
  %s4 = inlined_call_operand.vmem [shape: f32[1,128], index: 4, kind: input, shape index: {}]
  %s5 = inlined_call_operand.hbm [shape: f32[2,16,128], index: 5, kind: output, shape index: {}]
  %s6 = sld [smem:[#allocation0]]
  $region42: #{tpu_custom_call.1} parent=0
    _
  %s8 = ssub.s32 1, %s6
  %s9 = scalar_select 0, %s8, %s6
  $region1: #{tpu_custom_call.1} parent=0
    #allocation2 [shape = 'u8[16384]{0}', space=vmem, size = 0x4000, scoped, tag = 'input window, operand 0, single buffered']
    #allocation3 [shape = 's32[1]{0}', space=sflag, size = 0x4, scoped, tag = 'scoped memory for tpu_custom_call.1']
    #allocation4 [shape = 's32[1]{0}', space=sflag, size = 0x4, scoped, tag = 'scoped memory for tpu_custom_call.1']
    #allocation5 [shape = 'u8[98304]{0}', space=vmem, size = 0x18000, scoped, tag = 'input window, operand 1, single buffered']
    #allocation6 [shape = 's32[1]{0}', space=sflag, size = 0x4, scoped, tag = 'scoped memory for tpu_custom_call.1']
    #allocation7 [shape = 'u8[98304]{0}', space=vmem, size = 0x18000, scoped, tag = 'input window, operand 3, single buffered']
    #allocation8 [shape = 'u8[16384]{0}', space=vmem, size = 0x4000, scoped, tag = 'output window, operand 0, single buffered']
    %10 = vsyncpa [#allocation3], 0
    %11 = vsyncpa [#allocation6], 0
    %12 = vsyncpa [#allocation4], 0
    // Predicated region
    $region2: #{tpu_custom_call.1} parent=1 // pred_check
      _
    $region3: #{tpu_custom_call.1} parent=1 // pred_check_branch
      %14 = sbr.rel (0) target = $region5
    $region4: #{tpu_custom_call.1} parent=1 // pred_region
      %16 = vsyncadd [#allocation3], 0
      %s17 = sshll.u32 %s0, 4
      %s18 = int_to_ptr.hbm [resolvable:$true] %s17
      %s19 = sshll.u32 [#allocation2], 4
      %s20 = int_to_ptr.vmem [resolvable:$true] %s19
      %25 = dma.hbm_to_vmem [thread:$0]  %s18, 512, %s20, [#allocation3], 128, 128, 8
    $region5: #{tpu_custom_call.1} parent=1 // pred_fallthru
      _
    // Predicated region
    $region6: #{tpu_custom_call.1} parent=1 // pred_check
      _
    $region7: #{tpu_custom_call.1} parent=1 // pred_check_branch
      %27 = sbr.rel (0) target = $region9
    $region8: #{tpu_custom_call.1} parent=1 // pred_region
      %29 = vsyncadd [#allocation6], 0
      %s30 = sshll.u32 %s1, 4
      %s31 = int_to_ptr.hbm [resolvable:$true] %s30
      %s32 = sshll.u32 [#allocation5], 4
      %s33 = int_to_ptr.vmem [resolvable:$true] %s32
      %38 = dma.hbm_to_vmem [thread:$0]  %s31, 3072, %s33, [#allocation6], 64, 64, 4
    $region9: #{tpu_custom_call.1} parent=1 // pred_fallthru
      _
    // Predicated region
    $region10: #{tpu_custom_call.1} parent=1 // pred_check
      _
    $region11: #{tpu_custom_call.1} parent=1 // pred_check_branch
      %40 = sbr.rel (0) target = $region13
    $region12: #{tpu_custom_call.1} parent=1 // pred_region
      _
    $region13: #{tpu_custom_call.1} parent=1 // pred_fallthru
      _
    // Predicated region
    $region14: #{tpu_custom_call.1} parent=1 // pred_check
      _
    $region15: #{tpu_custom_call.1} parent=1 // pred_check_branch
      %42 = sbr.rel (0) target = $region17
    $region16: #{tpu_custom_call.1} parent=1 // pred_region
      %44 = vsyncadd [#allocation6], 0
      %s45 = sshll.u32 %s3, 4
      %s46 = int_to_ptr.hbm [resolvable:$true] %s45
      %s47 = sshll.u32 [#allocation7], 4
      %s48 = int_to_ptr.vmem [resolvable:$true] %s47
      %53 = dma.hbm_to_vmem [thread:$0]  %s46, 3072, %s48, [#allocation6], 64, 64, 4
    $region17: #{tpu_custom_call.1} parent=1 // pred_fallthru
      _
    // Predicated region
    $region18: #{tpu_custom_call.1} parent=1 // pred_check
      _
    $region19: #{tpu_custom_call.1} parent=1 // pred_check_branch
      %55 = sbr.rel (0) target = $region21
    $region20: #{tpu_custom_call.1} parent=1 // pred_region
      _
    $region21: #{tpu_custom_call.1} parent=1 // pred_fallthru
      _
    // Predicated region
    $region22: #{tpu_custom_call.1} parent=1 // pred_check
      _
    $region23: #{tpu_custom_call.1} parent=1 // pred_check_branch
      %57 = sbr.rel (0) target = $region25
    $region24: #{tpu_custom_call.1} parent=1 // pred_region
      %59 = dma.done [#allocation3], 512
    $region25: #{tpu_custom_call.1} parent=1 // pred_fallthru
      _
    // Predicated region
    $region26: #{tpu_custom_call.1} parent=1 // pred_check
      _
    $region27: #{tpu_custom_call.1} parent=1 // pred_check_branch
      %61 = sbr.rel (0) target = $region29
    $region28: #{tpu_custom_call.1} parent=1 // pred_region
      %63 = dma.done [#allocation6], 3072
    $region29: #{tpu_custom_call.1} parent=1 // pred_fallthru
      _
    // Predicated region
    $region30: #{tpu_custom_call.1} parent=1 // pred_check
      _
    $region31: #{tpu_custom_call.1} parent=1 // pred_check_branch
      %65 = sbr.rel (0) target = $region33
    $region32: #{tpu_custom_call.1} parent=1 // pred_region
      %67 = dma.done [#allocation6], 3072
    $region33: #{tpu_custom_call.1} parent=1 // pred_fallthru
      _
    %v69 = vld [vmem:[#allocation2] sm:$0xff]
    %v70 = vld [vmem:[#allocation2 + $0x8] sm:$0xff]
    %v71 = vld [vmem:[#allocation2 + $0x10] sm:$0xff]
    %v72 = vld [vmem:[#allocation2 + $0x18] sm:$0xff]
    %v73 = vpack.c.bf16 %v69, %v69
    %v74 = vpack.c.bf16 %v70, %v70
    %v75 = vpack.c.bf16 %v71, %v71
    %v76 = vpack.c.bf16 %v72, %v72
    %v81 = vunpack.c.l.b16 %v73
    %v82 = vunpack.c.l.b16 %v74
    %v83 = vunpack.c.l.b16 %v75
    %v84 = vunpack.c.l.b16 %v76
    %v85 = vpack.c.b16 %v82, %v81
    %v86 = vpack.c.b16 %v84, %v83
    %v88 = vshrl.u32 %v85, 16
    %v90 = vrot.slane %v88, 7
    %v91 = vshll.u32 %v85, 16
    %v93 = vor.u32 %v90, %v91
    %v95 = vshrl.u32 %v86, 16
    %v97 = vrot.slane %v95, 7
    %v98 = vshll.u32 %v86, 16
    %v100 = vor.u32 %v97, %v98
    %vm103 = vcmask 1040384
    %vm104 = vsmask.f32 256
    %vm105 = vmand %vm103, %vm104
    %v106 = vsel %vm105, 0, %v93
    %v107 = vsel %vm105, 0, %v100
    %v108 = vrot.slane %v91, 1
    %v109 = vor.u32 %v88, %v108
    %v110 = vrot.slane %v98, 1
    %v111 = vor.u32 %v95, %v110
    %vm114 = vcmask 1047552
    %vm115 = vsmask.f32 7424
    %vm116 = vmand %vm114, %vm115
    %v117 = vsel %vm116, %v109, 0
    %v118 = vsel %vm116, %v111, 0
    %v121 = vld [vmem:[#allocation5] sm:$0xf]
    %v122 = vld [vmem:[#allocation5 + $0x4] sm:$0xf]
    %v123 = vld [vmem:[#allocation5 + $0x8] sm:$0xf]
    %v124 = vld [vmem:[#allocation5 + $0xc] sm:$0xf]
    %v125 = vld [vmem:[#allocation5 + $0x10] sm:$0xf]
    %v126 = vld [vmem:[#allocation5 + $0x14] sm:$0xf]
    %v127 = vld [vmem:[#allocation5 + $0x18] sm:$0xf]
    %v128 = vld [vmem:[#allocation5 + $0x1c] sm:$0xf]
    %v129 = vld [vmem:[#allocation5 + $0x20] sm:$0xf]
    %v130 = vld [vmem:[#allocation5 + $0x24] sm:$0xf]
    %v131 = vld [vmem:[#allocation5 + $0x28] sm:$0xf]
    %v132 = vld [vmem:[#allocation5 + $0x2c] sm:$0xf]
    %v133 = vld [vmem:[#allocation5 + $0x30] sm:$0xf]
    %v134 = vld [vmem:[#allocation5 + $0x34] sm:$0xf]
    %v135 = vld [vmem:[#allocation5 + $0x38] sm:$0xf]
    %v136 = vld [vmem:[#allocation5 + $0x3c] sm:$0xf]
    %v137 = vld [vmem:[#allocation5 + $0x40] sm:$0xf]
    %v138 = vld [vmem:[#allocation5 + $0x44] sm:$0xf]
    %v139 = vld [vmem:[#allocation5 + $0x48] sm:$0xf]
    %v140 = vld [vmem:[#allocation5 + $0x4c] sm:$0xf]
    %v141 = vld [vmem:[#allocation5 + $0x50] sm:$0xf]
    %v142 = vld [vmem:[#allocation5 + $0x54] sm:$0xf]
    %v143 = vld [vmem:[#allocation5 + $0x58] sm:$0xf]
    %v144 = vld [vmem:[#allocation5 + $0x5c] sm:$0xf]
    %v145 = vld [vmem:[#allocation5 + $0x60] sm:$0xf]
    %v146 = vld [vmem:[#allocation5 + $0x64] sm:$0xf]
    %v147 = vld [vmem:[#allocation5 + $0x68] sm:$0xf]
    %v148 = vld [vmem:[#allocation5 + $0x6c] sm:$0xf]
    %v149 = vld [vmem:[#allocation5 + $0x70] sm:$0xf]
    %v150 = vld [vmem:[#allocation5 + $0x74] sm:$0xf]
    %v151 = vld [vmem:[#allocation5 + $0x78] sm:$0xf]
    %v152 = vld [vmem:[#allocation5 + $0x7c] sm:$0xf]
    %v153 = vld [vmem:[#allocation5 + $0x80] sm:$0xf]
    %v154 = vld [vmem:[#allocation5 + $0x84] sm:$0xf]
    %v155 = vld [vmem:[#allocation5 + $0x88] sm:$0xf]
    %v156 = vld [vmem:[#allocation5 + $0x8c] sm:$0xf]
    %v157 = vld [vmem:[#allocation5 + $0x90] sm:$0xf]
    %v158 = vld [vmem:[#allocation5 + $0x94] sm:$0xf]
    %v159 = vld [vmem:[#allocation5 + $0x98] sm:$0xf]
    %v160 = vld [vmem:[#allocation5 + $0x9c] sm:$0xf]
    %v161 = vld [vmem:[#allocation5 + $0xa0] sm:$0xf]
    %v162 = vld [vmem:[#allocation5 + $0xa4] sm:$0xf]
    %v163 = vld [vmem:[#allocation5 + $0xa8] sm:$0xf]
    %v164 = vld [vmem:[#allocation5 + $0xac] sm:$0xf]
    %v165 = vld [vmem:[#allocation5 + $0xb0] sm:$0xf]
    %v166 = vld [vmem:[#allocation5 + $0xb4] sm:$0xf]
    %v167 = vld [vmem:[#allocation5 + $0xb8] sm:$0xf]
    %v168 = vld [vmem:[#allocation5 + $0xbc] sm:$0xf]
    %v169 = vld [vmem:[%s2] sm:$0x1]
    %v171 = vperm.slane %v169, 0
    %v221 = vunpack.c.l.b16 %v121
    %v222 = vunpack.c.l.b16 %v122
    %v223 = vunpack.c.l.b16 %v123
    %v224 = vunpack.c.l.b16 %v124
    %v225 = vunpack.c.l.b16 %v125
    %v226 = vunpack.c.l.b16 %v126
    %v227 = vunpack.c.l.b16 %v127
    %v228 = vunpack.c.l.b16 %v128
    %v229 = vunpack.c.l.b16 %v129
    %v230 = vunpack.c.l.b16 %v130
    %v231 = vunpack.c.l.b16 %v131
    %v232 = vunpack.c.l.b16 %v132
    %v233 = vunpack.c.l.b16 %v133
    %v234 = vunpack.c.l.b16 %v134
    %v235 = vunpack.c.l.b16 %v135
    %v236 = vunpack.c.l.b16 %v136
    %v237 = vunpack.c.l.b16 %v137
    %v238 = vunpack.c.l.b16 %v138
    %v239 = vunpack.c.l.b16 %v139
    %v240 = vunpack.c.l.b16 %v140
    %v241 = vunpack.c.l.b16 %v141
    %v242 = vunpack.c.l.b16 %v142
    %v243 = vunpack.c.l.b16 %v143
    %v244 = vunpack.c.l.b16 %v144
    %v245 = vunpack.c.l.b16 %v145
    %v246 = vunpack.c.l.b16 %v146
    %v247 = vunpack.c.l.b16 %v147
    %v248 = vunpack.c.l.b16 %v148
    %v249 = vunpack.c.l.b16 %v149
    %v250 = vunpack.c.l.b16 %v150
    %v251 = vunpack.c.l.b16 %v151
    %v252 = vunpack.c.l.b16 %v152
    %v253 = vunpack.c.l.b16 %v153
    %v254 = vunpack.c.l.b16 %v154
    %v255 = vunpack.c.l.b16 %v155
    %v256 = vunpack.c.l.b16 %v156
    %v257 = vunpack.c.l.b16 %v157
    %v258 = vunpack.c.l.b16 %v158
    %v259 = vunpack.c.l.b16 %v159
    %v260 = vunpack.c.l.b16 %v160
    %v261 = vunpack.c.l.b16 %v161
    %v262 = vunpack.c.l.b16 %v162
    %v263 = vunpack.c.l.b16 %v163
    %v264 = vunpack.c.l.b16 %v164
    %v265 = vunpack.c.l.b16 %v165
    %v266 = vunpack.c.l.b16 %v166
    %v267 = vunpack.c.l.b16 %v167
    %v268 = vunpack.c.l.b16 %v168
    %v269 = vpack.c.b16 %v222, %v221
    %v270 = vpack.c.b16 %v224, %v223
    %v271 = vpack.c.b16 %v226, %v225
    %v272 = vpack.c.b16 %v228, %v227
    %v273 = vpack.c.b16 %v230, %v229
    %v274 = vpack.c.b16 %v232, %v231
    %v275 = vpack.c.b16 %v234, %v233
    %v276 = vpack.c.b16 %v236, %v235
    %v277 = vpack.c.b16 %v238, %v237
    %v278 = vpack.c.b16 %v240, %v239
    %v279 = vpack.c.b16 %v242, %v241
    %v280 = vpack.c.b16 %v244, %v243
    %v281 = vpack.c.b16 %v246, %v245
    %v282 = vpack.c.b16 %v248, %v247
    %v283 = vpack.c.b16 %v250, %v249
    %v284 = vpack.c.b16 %v252, %v251
    %v285 = vpack.c.b16 %v254, %v253
    %v286 = vpack.c.b16 %v256, %v255
    %v287 = vpack.c.b16 %v258, %v257
    %v288 = vpack.c.b16 %v260, %v259
    %v289 = vpack.c.b16 %v262, %v261
    %v290 = vpack.c.b16 %v264, %v263
    %v291 = vpack.c.b16 %v266, %v265
    %v292 = vpack.c.b16 %v268, %v267
    %317 = vmatpush.bf16.msra.mxu0 %v276
    %318 = vmatpush.bf16.msra.mxu0 %v275
    %319 = vmatpush.bf16.msra.mxu0 %v274
    %320 = vmatpush.bf16.msra.mxu0 %v273
    %321 = vmatpush.bf16.msra.mxu0 %v272
    %322 = vmatpush.bf16.msra.mxu0 %v271
    %323 = vmatpush.bf16.msra.mxu0 %v270
    %324 = vmatpush.bf16.msra.mxu0 %v269
    %325 = vmatmul.bf16.gmra.mxu0 %v106
    %v326 = vpop.f32.mrf.mxu0
    %v327 = vadd.f32 %v171, %v326
    %v328 = vpop.f32.mrf.mxu0
    %v329 = vadd.f32 %v171, %v328
    %330 = vmatmul.bf16.gmra.mxu0 %v107
    %v331 = vpop.f32.mrf.mxu0
    %v332 = vadd.f32 %v171, %v331
    %v333 = vpop.f32.mrf.mxu0
    %v334 = vadd.f32 %v171, %v333
    %335 = vdwg.mxu0
    %336 = vmatpush.bf16.msra.mxu0 %v284
    %337 = vmatpush.bf16.msra.mxu0 %v283
    %338 = vmatpush.bf16.msra.mxu0 %v282
    %339 = vmatpush.bf16.msra.mxu0 %v281
    %340 = vmatpush.bf16.msra.mxu0 %v280
    %341 = vmatpush.bf16.msra.mxu0 %v279
    %342 = vmatpush.bf16.msra.mxu0 %v278
    %343 = vmatpush.bf16.msra.mxu0 %v277
    %344 = vmatmul.bf16.gmra.mxu0 %v85
    %v345 = vpop.f32.mrf.mxu0
    %v346 = vadd.f32 %v327, %v345
    %v347 = vpop.f32.mrf.mxu0
    %v348 = vadd.f32 %v329, %v347
    %349 = vmatmul.bf16.gmra.mxu0 %v86
    %v350 = vpop.f32.mrf.mxu0
    %v351 = vadd.f32 %v332, %v350
    %v352 = vpop.f32.mrf.mxu0
    %v353 = vadd.f32 %v334, %v352
    %354 = vdwg.mxu0
    %355 = vmatpush.bf16.msra.mxu0 %v292
    %356 = vmatpush.bf16.msra.mxu0 %v291
    %357 = vmatpush.bf16.msra.mxu0 %v290
    %358 = vmatpush.bf16.msra.mxu0 %v289
    %359 = vmatpush.bf16.msra.mxu0 %v288
    %360 = vmatpush.bf16.msra.mxu0 %v287
    %361 = vmatpush.bf16.msra.mxu0 %v286
    %362 = vmatpush.bf16.msra.mxu0 %v285
    %363 = vmatmul.bf16.gmra.mxu0 %v117
    %v364 = vpop.f32.mrf.mxu0
    %v365 = vadd.f32 %v346, %v364
    %v366 = vpop.f32.mrf.mxu0
    %v367 = vadd.f32 %v348, %v366
    %368 = vmatmul.bf16.gmra.mxu0 %v118
    %v369 = vpop.f32.mrf.mxu0
    %v370 = vadd.f32 %v351, %v369
    %v371 = vpop.f32.mrf.mxu0
    %v372 = vadd.f32 %v353, %v371
    %373 = vdwg.mxu0
    %v374 = vmul.f32 %v365, 0.1
    %v375 = vmul.f32 %v367, 0.1
    %v376 = vmul.f32 %v370, 0.1
    %v377 = vmul.f32 %v372, 0.1
    %v378 = vmax.f32 %v365, %v374
    %v379 = vmax.f32 %v367, %v375
    %v380 = vmax.f32 %v370, %v376
    %v381 = vmax.f32 %v372, %v377
    %v382 = vpack.c.bf16 %v378, %v378
    %v383 = vpack.c.bf16 %v379, %v379
    %v384 = vpack.c.bf16 %v380, %v380
    %v385 = vpack.c.bf16 %v381, %v381
    %v390 = vunpack.c.l.b16 %v382
    %v391 = vunpack.c.l.b16 %v383
    %v392 = vunpack.c.l.b16 %v384
    %v393 = vunpack.c.l.b16 %v385
    %v394 = vpack.c.b16 %v391, %v390
    %v395 = vpack.c.b16 %v393, %v392
    %v397 = vshrl.u32 %v394, 16
    %v399 = vrot.slane %v397, 7
    %v400 = vshll.u32 %v394, 16
    %v402 = vor.u32 %v399, %v400
    %v404 = vshrl.u32 %v395, 16
    %v406 = vrot.slane %v404, 7
    %v407 = vshll.u32 %v395, 16
    %v409 = vor.u32 %v406, %v407
    %v412 = vsel %vm105, 0, %v402
    %v413 = vsel %vm105, 0, %v409
    %v414 = vrot.slane %v400, 1
    %v415 = vor.u32 %v397, %v414
    %v416 = vrot.slane %v407, 1
    %v417 = vor.u32 %v404, %v416
    %v420 = vsel %vm116, %v415, 0
    %v421 = vsel %vm116, %v417, 0
    %v424 = vld [vmem:[#allocation7] sm:$0xf]
    %v425 = vld [vmem:[#allocation7 + $0x4] sm:$0xf]
    %v426 = vld [vmem:[#allocation7 + $0x8] sm:$0xf]
    %v427 = vld [vmem:[#allocation7 + $0xc] sm:$0xf]
    %v428 = vld [vmem:[#allocation7 + $0x10] sm:$0xf]
    %v429 = vld [vmem:[#allocation7 + $0x14] sm:$0xf]
    %v430 = vld [vmem:[#allocation7 + $0x18] sm:$0xf]
    %v431 = vld [vmem:[#allocation7 + $0x1c] sm:$0xf]
    %v432 = vld [vmem:[#allocation7 + $0x20] sm:$0xf]
    %v433 = vld [vmem:[#allocation7 + $0x24] sm:$0xf]
    %v434 = vld [vmem:[#allocation7 + $0x28] sm:$0xf]
    %v435 = vld [vmem:[#allocation7 + $0x2c] sm:$0xf]
    %v436 = vld [vmem:[#allocation7 + $0x30] sm:$0xf]
    %v437 = vld [vmem:[#allocation7 + $0x34] sm:$0xf]
    %v438 = vld [vmem:[#allocation7 + $0x38] sm:$0xf]
    %v439 = vld [vmem:[#allocation7 + $0x3c] sm:$0xf]
    %v440 = vld [vmem:[#allocation7 + $0x40] sm:$0xf]
    %v441 = vld [vmem:[#allocation7 + $0x44] sm:$0xf]
    %v442 = vld [vmem:[#allocation7 + $0x48] sm:$0xf]
    %v443 = vld [vmem:[#allocation7 + $0x4c] sm:$0xf]
    %v444 = vld [vmem:[#allocation7 + $0x50] sm:$0xf]
    %v445 = vld [vmem:[#allocation7 + $0x54] sm:$0xf]
    %v446 = vld [vmem:[#allocation7 + $0x58] sm:$0xf]
    %v447 = vld [vmem:[#allocation7 + $0x5c] sm:$0xf]
    %v448 = vld [vmem:[#allocation7 + $0x60] sm:$0xf]
    %v449 = vld [vmem:[#allocation7 + $0x64] sm:$0xf]
    %v450 = vld [vmem:[#allocation7 + $0x68] sm:$0xf]
    %v451 = vld [vmem:[#allocation7 + $0x6c] sm:$0xf]
    %v452 = vld [vmem:[#allocation7 + $0x70] sm:$0xf]
    %v453 = vld [vmem:[#allocation7 + $0x74] sm:$0xf]
    %v454 = vld [vmem:[#allocation7 + $0x78] sm:$0xf]
    %v455 = vld [vmem:[#allocation7 + $0x7c] sm:$0xf]
    %v456 = vld [vmem:[#allocation7 + $0x80] sm:$0xf]
    %v457 = vld [vmem:[#allocation7 + $0x84] sm:$0xf]
    %v458 = vld [vmem:[#allocation7 + $0x88] sm:$0xf]
    %v459 = vld [vmem:[#allocation7 + $0x8c] sm:$0xf]
    %v460 = vld [vmem:[#allocation7 + $0x90] sm:$0xf]
    %v461 = vld [vmem:[#allocation7 + $0x94] sm:$0xf]
    %v462 = vld [vmem:[#allocation7 + $0x98] sm:$0xf]
    %v463 = vld [vmem:[#allocation7 + $0x9c] sm:$0xf]
    %v464 = vld [vmem:[#allocation7 + $0xa0] sm:$0xf]
    %v465 = vld [vmem:[#allocation7 + $0xa4] sm:$0xf]
    %v466 = vld [vmem:[#allocation7 + $0xa8] sm:$0xf]
    %v467 = vld [vmem:[#allocation7 + $0xac] sm:$0xf]
    %v468 = vld [vmem:[#allocation7 + $0xb0] sm:$0xf]
    %v469 = vld [vmem:[#allocation7 + $0xb4] sm:$0xf]
    %v470 = vld [vmem:[#allocation7 + $0xb8] sm:$0xf]
    %v471 = vld [vmem:[#allocation7 + $0xbc] sm:$0xf]
    %v472 = vld [vmem:[%s4] sm:$0x1]
    %v474 = vperm.slane %v472, 0
    %v524 = vunpack.c.l.b16 %v424
    %v525 = vunpack.c.l.b16 %v425
    %v526 = vunpack.c.l.b16 %v426
    %v527 = vunpack.c.l.b16 %v427
    %v528 = vunpack.c.l.b16 %v428
    %v529 = vunpack.c.l.b16 %v429
    %v530 = vunpack.c.l.b16 %v430
    %v531 = vunpack.c.l.b16 %v431
    %v532 = vunpack.c.l.b16 %v432
    %v533 = vunpack.c.l.b16 %v433
    %v534 = vunpack.c.l.b16 %v434
    %v535 = vunpack.c.l.b16 %v435
    %v536 = vunpack.c.l.b16 %v436
    %v537 = vunpack.c.l.b16 %v437
    %v538 = vunpack.c.l.b16 %v438
    %v539 = vunpack.c.l.b16 %v439
    %v540 = vunpack.c.l.b16 %v440
    %v541 = vunpack.c.l.b16 %v441
    %v542 = vunpack.c.l.b16 %v442
    %v543 = vunpack.c.l.b16 %v443
    %v544 = vunpack.c.l.b16 %v444
    %v545 = vunpack.c.l.b16 %v445
    %v546 = vunpack.c.l.b16 %v446
    %v547 = vunpack.c.l.b16 %v447
    %v548 = vunpack.c.l.b16 %v448
    %v549 = vunpack.c.l.b16 %v449
    %v550 = vunpack.c.l.b16 %v450
    %v551 = vunpack.c.l.b16 %v451
    %v552 = vunpack.c.l.b16 %v452
    %v553 = vunpack.c.l.b16 %v453
    %v554 = vunpack.c.l.b16 %v454
    %v555 = vunpack.c.l.b16 %v455
    %v556 = vunpack.c.l.b16 %v456
    %v557 = vunpack.c.l.b16 %v457
    %v558 = vunpack.c.l.b16 %v458
    %v559 = vunpack.c.l.b16 %v459
    %v560 = vunpack.c.l.b16 %v460
    %v561 = vunpack.c.l.b16 %v461
    %v562 = vunpack.c.l.b16 %v462
    %v563 = vunpack.c.l.b16 %v463
    %v564 = vunpack.c.l.b16 %v464
    %v565 = vunpack.c.l.b16 %v465
    %v566 = vunpack.c.l.b16 %v466
    %v567 = vunpack.c.l.b16 %v467
    %v568 = vunpack.c.l.b16 %v468
    %v569 = vunpack.c.l.b16 %v469
    %v570 = vunpack.c.l.b16 %v470
    %v571 = vunpack.c.l.b16 %v471
    %v572 = vpack.c.b16 %v525, %v524
    %v573 = vpack.c.b16 %v527, %v526
    %v574 = vpack.c.b16 %v529, %v528
    %v575 = vpack.c.b16 %v531, %v530
    %v576 = vpack.c.b16 %v533, %v532
    %v577 = vpack.c.b16 %v535, %v534
    %v578 = vpack.c.b16 %v537, %v536
    %v579 = vpack.c.b16 %v539, %v538
    %v580 = vpack.c.b16 %v541, %v540
    %v581 = vpack.c.b16 %v543, %v542
    %v582 = vpack.c.b16 %v545, %v544
    %v583 = vpack.c.b16 %v547, %v546
    %v584 = vpack.c.b16 %v549, %v548
    %v585 = vpack.c.b16 %v551, %v550
    %v586 = vpack.c.b16 %v553, %v552
    %v587 = vpack.c.b16 %v555, %v554
    %v588 = vpack.c.b16 %v557, %v556
    %v589 = vpack.c.b16 %v559, %v558
    %v590 = vpack.c.b16 %v561, %v560
    %v591 = vpack.c.b16 %v563, %v562
    %v592 = vpack.c.b16 %v565, %v564
    %v593 = vpack.c.b16 %v567, %v566
    %v594 = vpack.c.b16 %v569, %v568
    %v595 = vpack.c.b16 %v571, %v570
    %620 = vmatpush.bf16.msra.mxu0 %v579
    %621 = vmatpush.bf16.msra.mxu0 %v578
    %622 = vmatpush.bf16.msra.mxu0 %v577
    %623 = vmatpush.bf16.msra.mxu0 %v576
    %624 = vmatpush.bf16.msra.mxu0 %v575
    %625 = vmatpush.bf16.msra.mxu0 %v574
    %626 = vmatpush.bf16.msra.mxu0 %v573
    %627 = vmatpush.bf16.msra.mxu0 %v572
    %628 = vmatmul.bf16.gmra.mxu0 %v412
    %v629 = vpop.f32.mrf.mxu0
    %v630 = vadd.f32 %v474, %v629
    %v631 = vpop.f32.mrf.mxu0
    %v632 = vadd.f32 %v474, %v631
    %633 = vmatmul.bf16.gmra.mxu0 %v413
    %v634 = vpop.f32.mrf.mxu0
    %v635 = vadd.f32 %v474, %v634
    %v636 = vpop.f32.mrf.mxu0
    %v637 = vadd.f32 %v474, %v636
    %638 = vdwg.mxu0
    %639 = vmatpush.bf16.msra.mxu0 %v587
    %640 = vmatpush.bf16.msra.mxu0 %v586
    %641 = vmatpush.bf16.msra.mxu0 %v585
    %642 = vmatpush.bf16.msra.mxu0 %v584
    %643 = vmatpush.bf16.msra.mxu0 %v583
    %644 = vmatpush.bf16.msra.mxu0 %v582
    %645 = vmatpush.bf16.msra.mxu0 %v581
    %646 = vmatpush.bf16.msra.mxu0 %v580
    %647 = vmatmul.bf16.gmra.mxu0 %v394
    %v648 = vpop.f32.mrf.mxu0
    %v649 = vadd.f32 %v630, %v648
    %v650 = vpop.f32.mrf.mxu0
    %v651 = vadd.f32 %v632, %v650
    %652 = vmatmul.bf16.gmra.mxu0 %v395
    %v653 = vpop.f32.mrf.mxu0
    %v654 = vadd.f32 %v635, %v653
    %v655 = vpop.f32.mrf.mxu0
    %v656 = vadd.f32 %v637, %v655
    %657 = vdwg.mxu0
    %658 = vmatpush.bf16.msra.mxu0 %v595
    %659 = vmatpush.bf16.msra.mxu0 %v594
    %660 = vmatpush.bf16.msra.mxu0 %v593
    %661 = vmatpush.bf16.msra.mxu0 %v592
    %662 = vmatpush.bf16.msra.mxu0 %v591
    %663 = vmatpush.bf16.msra.mxu0 %v590
    %664 = vmatpush.bf16.msra.mxu0 %v589
    %665 = vmatpush.bf16.msra.mxu0 %v588
    %666 = vmatmul.bf16.gmra.mxu0 %v420
    %v667 = vpop.f32.mrf.mxu0
    %v668 = vadd.f32 %v649, %v667
    %v669 = vpop.f32.mrf.mxu0
    %v670 = vadd.f32 %v651, %v669
    %671 = vmatmul.bf16.gmra.mxu0 %v421
    %v672 = vpop.f32.mrf.mxu0
    %v673 = vadd.f32 %v654, %v672
    %v674 = vpop.f32.mrf.mxu0
    %v675 = vadd.f32 %v656, %v674
    %676 = vdwg.mxu0
    %v677 = vadd.f32 %v668, %v69
    %v678 = vadd.f32 %v670, %v70
    %v679 = vadd.f32 %v673, %v71
    %v680 = vadd.f32 %v675, %v72
    %681 = vst [vmem:[#allocation8] sm:$0xff] %v677
    %682 = vst [vmem:[#allocation8 + $0x8] sm:$0xff] %v678
    %683 = vst [vmem:[#allocation8 + $0x10] sm:$0xff] %v679
    %684 = vst [vmem:[#allocation8 + $0x18] sm:$0xff] %v680
    // Predicated region
    $region34: #{tpu_custom_call.1} parent=1 // pred_check
      _
    $region35: #{tpu_custom_call.1} parent=1 // pred_check_branch
      %686 = sbr.rel (0) target = $region37
    $region36: #{tpu_custom_call.1} parent=1 // pred_region
      %688 = vsyncadd [#allocation4], 0
      %s689 = sshll.u32 [#allocation8], 4
      %s690 = int_to_ptr.vmem [resolvable:$true] %s689
      %s691 = sshll.u32 %s5, 4
      %s692 = int_to_ptr.hbm [resolvable:$true] %s691
      %697 = dma.vmem_to_hbm [thread:$0]  %s690, 512, %s692, [#allocation4], 128, 128, 8
    $region37: #{tpu_custom_call.1} parent=1 // pred_fallthru
      _
    // Predicated region
    $region38: #{tpu_custom_call.1} parent=1 // pred_check
      _
    $region39: #{tpu_custom_call.1} parent=1 // pred_check_branch
      %699 = sbr.rel (0) target = $region41
    $region40: #{tpu_custom_call.1} parent=1 // pred_region
      %701 = dma.done [#allocation4], 512
    $region41: #{tpu_custom_call.1} parent=1 // pred_fallthru
      _
    %702 = vsyncpa [#allocation3], 1
    %703 = vsyncpa [#allocation6], 1
    %704 = vsyncpa [#allocation4], 1

// kernel: tpu_custom_call.1
$region0: #{tpu_custom_call.1}
  #allocation0 [shape = 'u32[]', space=smem, size = 0x4, offset = 0x4, fixed_abs, tag = 'smem constant byte address 0x4 - core index']
  #allocation1 [shape = 'u32[72,128]{1,0:T(1,128)}', space=vmem, size = 0x9000, scoped, tag = 'internal scratch']
  %s0 = inlined_call_operand.hbm [shape: f32[2,16,128], index: 0, kind: input, shape index: {}]
  %s1 = inlined_call_operand.hbm [shape: bf16[384,128], index: 1, kind: input, shape index: {}]
  %s2 = inlined_call_operand.vmem [shape: f32[1,128], index: 2, kind: input, shape index: {}]
  %s3 = inlined_call_operand.hbm [shape: bf16[384,128], index: 3, kind: input, shape index: {}]
  %s4 = inlined_call_operand.vmem [shape: f32[1,128], index: 4, kind: input, shape index: {}]
  %s5 = inlined_call_operand.hbm [shape: f32[2,16,128], index: 5, kind: output, shape index: {}]
  %s6 = sld [smem:[#allocation0]]
  $region42: #{tpu_custom_call.1} parent=0
    _
  %s8 = ssub.s32 1, %s6
  %s9 = scalar_select 0, %s8, %s6
  $region1: #{tpu_custom_call.1} parent=0
    #allocation2 [shape = 'u8[16384]{0}', space=vmem, size = 0x4000, scoped, tag = 'input window, operand 0, single buffered']
    #allocation3 [shape = 's32[1]{0}', space=sflag, size = 0x4, scoped, tag = 'scoped memory for tpu_custom_call.1']
    #allocation4 [shape = 's32[1]{0}', space=sflag, size = 0x4, scoped, tag = 'scoped memory for tpu_custom_call.1']
    #allocation5 [shape = 'u8[98304]{0}', space=vmem, size = 0x18000, scoped, tag = 'input window, operand 1, single buffered']
    #allocation6 [shape = 's32[1]{0}', space=sflag, size = 0x4, scoped, tag = 'scoped memory for tpu_custom_call.1']
    #allocation7 [shape = 'u8[98304]{0}', space=vmem, size = 0x18000, scoped, tag = 'input window, operand 3, single buffered']
    #allocation8 [shape = 'u8[16384]{0}', space=vmem, size = 0x4000, scoped, tag = 'output window, operand 0, single buffered']
    %10 = vsyncpa [#allocation3], 0
    %11 = vsyncpa [#allocation6], 0
    %12 = vsyncpa [#allocation4], 0
    // Predicated region
    $region2: #{tpu_custom_call.1} parent=1 // pred_check
      _
    $region3: #{tpu_custom_call.1} parent=1 // pred_check_branch
      %14 = sbr.rel (0) target = $region5
    $region4: #{tpu_custom_call.1} parent=1 // pred_region
      %16 = vsyncadd [#allocation3], 0
      %s17 = sshll.u32 %s0, 4
      %s18 = int_to_ptr.hbm [resolvable:$true] %s17
      %s19 = sshll.u32 [#allocation2], 4
      %s20 = int_to_ptr.vmem [resolvable:$true] %s19
      %25 = dma.hbm_to_vmem [thread:$0]  %s18, 512, %s20, [#allocation3], 128, 128, 8
    $region5: #{tpu_custom_call.1} parent=1 // pred_fallthru
      _
    // Predicated region
    $region6: #{tpu_custom_call.1} parent=1 // pred_check
      _
    $region7: #{tpu_custom_call.1} parent=1 // pred_check_branch
      %27 = sbr.rel (0) target = $region9
    $region8: #{tpu_custom_call.1} parent=1 // pred_region
      %29 = vsyncadd [#allocation6], 0
      %s30 = sshll.u32 %s1, 4
      %s31 = int_to_ptr.hbm [resolvable:$true] %s30
      %s32 = sshll.u32 [#allocation5], 4
      %s33 = int_to_ptr.vmem [resolvable:$true] %s32
      %38 = dma.hbm_to_vmem [thread:$0]  %s31, 3072, %s33, [#allocation6], 64, 64, 4
    $region9: #{tpu_custom_call.1} parent=1 // pred_fallthru
      _
    // Predicated region
    $region10: #{tpu_custom_call.1} parent=1 // pred_check
      _
    $region11: #{tpu_custom_call.1} parent=1 // pred_check_branch
      %40 = sbr.rel (0) target = $region13
    $region12: #{tpu_custom_call.1} parent=1 // pred_region
      _
    $region13: #{tpu_custom_call.1} parent=1 // pred_fallthru
      _
    // Predicated region
    $region14: #{tpu_custom_call.1} parent=1 // pred_check
      _
    $region15: #{tpu_custom_call.1} parent=1 // pred_check_branch
      %42 = sbr.rel (0) target = $region17
    $region16: #{tpu_custom_call.1} parent=1 // pred_region
      %44 = vsyncadd [#allocation6], 0
      %s45 = sshll.u32 %s3, 4
      %s46 = int_to_ptr.hbm [resolvable:$true] %s45
      %s47 = sshll.u32 [#allocation7], 4
      %s48 = int_to_ptr.vmem [resolvable:$true] %s47
      %53 = dma.hbm_to_vmem [thread:$0]  %s46, 3072, %s48, [#allocation6], 64, 64, 4
    $region17: #{tpu_custom_call.1} parent=1 // pred_fallthru
      _
    // Predicated region
    $region18: #{tpu_custom_call.1} parent=1 // pred_check
      _
    $region19: #{tpu_custom_call.1} parent=1 // pred_check_branch
      %55 = sbr.rel (0) target = $region21
    $region20: #{tpu_custom_call.1} parent=1 // pred_region
      _
    $region21: #{tpu_custom_call.1} parent=1 // pred_fallthru
      _
    // Predicated region
    $region22: #{tpu_custom_call.1} parent=1 // pred_check
      _
    $region23: #{tpu_custom_call.1} parent=1 // pred_check_branch
      %57 = sbr.rel (0) target = $region25
    $region24: #{tpu_custom_call.1} parent=1 // pred_region
      %59 = dma.done [#allocation3], 512
    $region25: #{tpu_custom_call.1} parent=1 // pred_fallthru
      _
    // Predicated region
    $region26: #{tpu_custom_call.1} parent=1 // pred_check
      _
    $region27: #{tpu_custom_call.1} parent=1 // pred_check_branch
      %61 = sbr.rel (0) target = $region29
    $region28: #{tpu_custom_call.1} parent=1 // pred_region
      %63 = dma.done [#allocation6], 3072
    $region29: #{tpu_custom_call.1} parent=1 // pred_fallthru
      _
    // Predicated region
    $region30: #{tpu_custom_call.1} parent=1 // pred_check
      _
    $region31: #{tpu_custom_call.1} parent=1 // pred_check_branch
      %65 = sbr.rel (0) target = $region33
    $region32: #{tpu_custom_call.1} parent=1 // pred_region
      %67 = dma.done [#allocation6], 3072
    $region33: #{tpu_custom_call.1} parent=1 // pred_fallthru
      _
    %v69 = vld [vmem:[#allocation2] sm:$0xff]
    %v70 = vld [vmem:[#allocation2 + $0x8] sm:$0xff]
    %v71 = vld [vmem:[#allocation2 + $0x10] sm:$0xff]
    %v72 = vld [vmem:[#allocation2 + $0x18] sm:$0xff]
    %v73 = vpack.c.bf16 %v69, %v69
    %v74 = vpack.c.bf16 %v70, %v70
    %v75 = vpack.c.bf16 %v71, %v71
    %v76 = vpack.c.bf16 %v72, %v72
    %v81 = vunpack.c.l.b16 %v73
    %v82 = vunpack.c.l.b16 %v74
    %v83 = vunpack.c.l.b16 %v75
    %v84 = vunpack.c.l.b16 %v76
    %v85 = vpack.c.b16 %v82, %v81
    %v86 = vpack.c.b16 %v84, %v83
    %v88 = vshrl.u32 %v85, 16
    %v90 = vrot.slane %v88, 7
    %v91 = vshll.u32 %v85, 16
    %v93 = vor.u32 %v90, %v91
    %v95 = vshrl.u32 %v86, 16
    %v97 = vrot.slane %v95, 7
    %v98 = vshll.u32 %v86, 16
    %v100 = vor.u32 %v97, %v98
    %vm103 = vcmask 1040384
    %vm104 = vsmask.f32 256
    %vm105 = vmand %vm103, %vm104
    %v106 = vsel %vm105, 0, %v93
    %v107 = vsel %vm105, 0, %v100
    %v108 = vrot.slane %v91, 1
    %v109 = vor.u32 %v88, %v108
    %v110 = vrot.slane %v98, 1
    %v111 = vor.u32 %v95, %v110
    %vm114 = vcmask 1047552
    %vm115 = vsmask.f32 7424
    %vm116 = vmand %vm114, %vm115
    %v117 = vsel %vm116, %v109, 0
    %v118 = vsel %vm116, %v111, 0
    %v121 = vld [vmem:[#allocation5] sm:$0xf]
    %v122 = vld [vmem:[#allocation5 + $0x4] sm:$0xf]
    %v123 = vld [vmem:[#allocation5 + $0x8] sm:$0xf]
    %v124 = vld [vmem:[#allocation5 + $0xc] sm:$0xf]
    %v125 = vld [vmem:[#allocation5 + $0x10] sm:$0xf]
    %v126 = vld [vmem:[#allocation5 + $0x14] sm:$0xf]
    %v127 = vld [vmem:[#allocation5 + $0x18] sm:$0xf]
    %v128 = vld [vmem:[#allocation5 + $0x1c] sm:$0xf]
    %v129 = vld [vmem:[#allocation5 + $0x20] sm:$0xf]
    %v130 = vld [vmem:[#allocation5 + $0x24] sm:$0xf]
    %v131 = vld [vmem:[#allocation5 + $0x28] sm:$0xf]
    %v132 = vld [vmem:[#allocation5 + $0x2c] sm:$0xf]
    %v133 = vld [vmem:[#allocation5 + $0x30] sm:$0xf]
    %v134 = vld [vmem:[#allocation5 + $0x34] sm:$0xf]
    %v135 = vld [vmem:[#allocation5 + $0x38] sm:$0xf]
    %v136 = vld [vmem:[#allocation5 + $0x3c] sm:$0xf]
    %v137 = vld [vmem:[#allocation5 + $0x40] sm:$0xf]
    %v138 = vld [vmem:[#allocation5 + $0x44] sm:$0xf]
    %v139 = vld [vmem:[#allocation5 + $0x48] sm:$0xf]
    %v140 = vld [vmem:[#allocation5 + $0x4c] sm:$0xf]
    %v141 = vld [vmem:[#allocation5 + $0x50] sm:$0xf]
    %v142 = vld [vmem:[#allocation5 + $0x54] sm:$0xf]
    %v143 = vld [vmem:[#allocation5 + $0x58] sm:$0xf]
    %v144 = vld [vmem:[#allocation5 + $0x5c] sm:$0xf]
    %v145 = vld [vmem:[#allocation5 + $0x60] sm:$0xf]
    %v146 = vld [vmem:[#allocation5 + $0x64] sm:$0xf]
    %v147 = vld [vmem:[#allocation5 + $0x68] sm:$0xf]
    %v148 = vld [vmem:[#allocation5 + $0x6c] sm:$0xf]
    %v149 = vld [vmem:[#allocation5 + $0x70] sm:$0xf]
    %v150 = vld [vmem:[#allocation5 + $0x74] sm:$0xf]
    %v151 = vld [vmem:[#allocation5 + $0x78] sm:$0xf]
    %v152 = vld [vmem:[#allocation5 + $0x7c] sm:$0xf]
    %v153 = vld [vmem:[#allocation5 + $0x80] sm:$0xf]
    %v154 = vld [vmem:[#allocation5 + $0x84] sm:$0xf]
    %v155 = vld [vmem:[#allocation5 + $0x88] sm:$0xf]
    %v156 = vld [vmem:[#allocation5 + $0x8c] sm:$0xf]
    %v157 = vld [vmem:[#allocation5 + $0x90] sm:$0xf]
    %v158 = vld [vmem:[#allocation5 + $0x94] sm:$0xf]
    %v159 = vld [vmem:[#allocation5 + $0x98] sm:$0xf]
    %v160 = vld [vmem:[#allocation5 + $0x9c] sm:$0xf]
    %v161 = vld [vmem:[#allocation5 + $0xa0] sm:$0xf]
    %v162 = vld [vmem:[#allocation5 + $0xa4] sm:$0xf]
    %v163 = vld [vmem:[#allocation5 + $0xa8] sm:$0xf]
    %v164 = vld [vmem:[#allocation5 + $0xac] sm:$0xf]
    %v165 = vld [vmem:[#allocation5 + $0xb0] sm:$0xf]
    %v166 = vld [vmem:[#allocation5 + $0xb4] sm:$0xf]
    %v167 = vld [vmem:[#allocation5 + $0xb8] sm:$0xf]
    %v168 = vld [vmem:[#allocation5 + $0xbc] sm:$0xf]
    %v169 = vld [vmem:[%s2] sm:$0x1]
    %v171 = vperm.slane %v169, 0
    %v221 = vunpack.c.l.b16 %v121
    %v222 = vunpack.c.l.b16 %v122
    %v223 = vunpack.c.l.b16 %v123
    %v224 = vunpack.c.l.b16 %v124
    %v225 = vunpack.c.l.b16 %v125
    %v226 = vunpack.c.l.b16 %v126
    %v227 = vunpack.c.l.b16 %v127
    %v228 = vunpack.c.l.b16 %v128
    %v229 = vunpack.c.l.b16 %v129
    %v230 = vunpack.c.l.b16 %v130
    %v231 = vunpack.c.l.b16 %v131
    %v232 = vunpack.c.l.b16 %v132
    %v233 = vunpack.c.l.b16 %v133
    %v234 = vunpack.c.l.b16 %v134
    %v235 = vunpack.c.l.b16 %v135
    %v236 = vunpack.c.l.b16 %v136
    %v237 = vunpack.c.l.b16 %v137
    %v238 = vunpack.c.l.b16 %v138
    %v239 = vunpack.c.l.b16 %v139
    %v240 = vunpack.c.l.b16 %v140
    %v241 = vunpack.c.l.b16 %v141
    %v242 = vunpack.c.l.b16 %v142
    %v243 = vunpack.c.l.b16 %v143
    %v244 = vunpack.c.l.b16 %v144
    %v245 = vunpack.c.l.b16 %v145
    %v246 = vunpack.c.l.b16 %v146
    %v247 = vunpack.c.l.b16 %v147
    %v248 = vunpack.c.l.b16 %v148
    %v249 = vunpack.c.l.b16 %v149
    %v250 = vunpack.c.l.b16 %v150
    %v251 = vunpack.c.l.b16 %v151
    %v252 = vunpack.c.l.b16 %v152
    %v253 = vunpack.c.l.b16 %v153
    %v254 = vunpack.c.l.b16 %v154
    %v255 = vunpack.c.l.b16 %v155
    %v256 = vunpack.c.l.b16 %v156
    %v257 = vunpack.c.l.b16 %v157
    %v258 = vunpack.c.l.b16 %v158
    %v259 = vunpack.c.l.b16 %v159
    %v260 = vunpack.c.l.b16 %v160
    %v261 = vunpack.c.l.b16 %v161
    %v262 = vunpack.c.l.b16 %v162
    %v263 = vunpack.c.l.b16 %v163
    %v264 = vunpack.c.l.b16 %v164
    %v265 = vunpack.c.l.b16 %v165
    %v266 = vunpack.c.l.b16 %v166
    %v267 = vunpack.c.l.b16 %v167
    %v268 = vunpack.c.l.b16 %v168
    %v269 = vpack.c.b16 %v222, %v221
    %v270 = vpack.c.b16 %v224, %v223
    %v271 = vpack.c.b16 %v226, %v225
    %v272 = vpack.c.b16 %v228, %v227
    %v273 = vpack.c.b16 %v230, %v229
    %v274 = vpack.c.b16 %v232, %v231
    %v275 = vpack.c.b16 %v234, %v233
    %v276 = vpack.c.b16 %v236, %v235
    %v277 = vpack.c.b16 %v238, %v237
    %v278 = vpack.c.b16 %v240, %v239
    %v279 = vpack.c.b16 %v242, %v241
    %v280 = vpack.c.b16 %v244, %v243
    %v281 = vpack.c.b16 %v246, %v245
    %v282 = vpack.c.b16 %v248, %v247
    %v283 = vpack.c.b16 %v250, %v249
    %v284 = vpack.c.b16 %v252, %v251
    %v285 = vpack.c.b16 %v254, %v253
    %v286 = vpack.c.b16 %v256, %v255
    %v287 = vpack.c.b16 %v258, %v257
    %v288 = vpack.c.b16 %v260, %v259
    %v289 = vpack.c.b16 %v262, %v261
    %v290 = vpack.c.b16 %v264, %v263
    %v291 = vpack.c.b16 %v266, %v265
    %v292 = vpack.c.b16 %v268, %v267
    %317 = vmatpush.bf16.msra.mxu0 %v276
    %318 = vmatpush.bf16.msra.mxu0 %v275
    %319 = vmatpush.bf16.msra.mxu0 %v274
    %320 = vmatpush.bf16.msra.mxu0 %v273
    %321 = vmatpush.bf16.msra.mxu0 %v272
    %322 = vmatpush.bf16.msra.mxu0 %v271
    %323 = vmatpush.bf16.msra.mxu0 %v270
    %324 = vmatpush.bf16.msra.mxu0 %v269
    %325 = vmatmul.bf16.gmra.mxu0 %v106
    %v326 = vpop.f32.mrf.mxu0
    %v327 = vadd.f32 %v171, %v326
    %v328 = vpop.f32.mrf.mxu0
    %v329 = vadd.f32 %v171, %v328
    %330 = vmatmul.bf16.gmra.mxu0 %v107
    %v331 = vpop.f32.mrf.mxu0
    %v332 = vadd.f32 %v171, %v331
    %v333 = vpop.f32.mrf.mxu0
    %v334 = vadd.f32 %v171, %v333
    %335 = vdwg.mxu0
    %336 = vmatpush.bf16.msra.mxu0 %v284
    %337 = vmatpush.bf16.msra.mxu0 %v283
    %338 = vmatpush.bf16.msra.mxu0 %v282
    %339 = vmatpush.bf16.msra.mxu0 %v281
    %340 = vmatpush.bf16.msra.mxu0 %v280
    %341 = vmatpush.bf16.msra.mxu0 %v279
    %342 = vmatpush.bf16.msra.mxu0 %v278
    %343 = vmatpush.bf16.msra.mxu0 %v277
    %344 = vmatmul.bf16.gmra.mxu0 %v85
    %v345 = vpop.f32.mrf.mxu0
    %v346 = vadd.f32 %v327, %v345
    %v347 = vpop.f32.mrf.mxu0
    %v348 = vadd.f32 %v329, %v347
    %349 = vmatmul.bf16.gmra.mxu0 %v86
    %v350 = vpop.f32.mrf.mxu0
    %v351 = vadd.f32 %v332, %v350
    %v352 = vpop.f32.mrf.mxu0
    %v353 = vadd.f32 %v334, %v352
    %354 = vdwg.mxu0
    %355 = vmatpush.bf16.msra.mxu0 %v292
    %356 = vmatpush.bf16.msra.mxu0 %v291
    %357 = vmatpush.bf16.msra.mxu0 %v290
    %358 = vmatpush.bf16.msra.mxu0 %v289
    %359 = vmatpush.bf16.msra.mxu0 %v288
    %360 = vmatpush.bf16.msra.mxu0 %v287
    %361 = vmatpush.bf16.msra.mxu0 %v286
    %362 = vmatpush.bf16.msra.mxu0 %v285
    %363 = vmatmul.bf16.gmra.mxu0 %v117
    %v364 = vpop.f32.mrf.mxu0
    %v365 = vadd.f32 %v346, %v364
    %v366 = vpop.f32.mrf.mxu0
    %v367 = vadd.f32 %v348, %v366
    %368 = vmatmul.bf16.gmra.mxu0 %v118
    %v369 = vpop.f32.mrf.mxu0
    %v370 = vadd.f32 %v351, %v369
    %v371 = vpop.f32.mrf.mxu0
    %v372 = vadd.f32 %v353, %v371
    %373 = vdwg.mxu0
    %v374 = vmul.f32 %v365, 0.1
    %v375 = vmul.f32 %v367, 0.1
    %v376 = vmul.f32 %v370, 0.1
    %v377 = vmul.f32 %v372, 0.1
    %v378 = vmax.f32 %v365, %v374
    %v379 = vmax.f32 %v367, %v375
    %v380 = vmax.f32 %v370, %v376
    %v381 = vmax.f32 %v372, %v377
    %v382 = vpack.c.bf16 %v378, %v378
    %v383 = vpack.c.bf16 %v379, %v379
    %v384 = vpack.c.bf16 %v380, %v380
    %v385 = vpack.c.bf16 %v381, %v381
    %v390 = vunpack.c.l.b16 %v382
    %v391 = vunpack.c.l.b16 %v383
    %v392 = vunpack.c.l.b16 %v384
    %v393 = vunpack.c.l.b16 %v385
    %v394 = vpack.c.b16 %v391, %v390
    %v395 = vpack.c.b16 %v393, %v392
    %v397 = vshrl.u32 %v394, 16
    %v399 = vrot.slane %v397, 7
    %v400 = vshll.u32 %v394, 16
    %v402 = vor.u32 %v399, %v400
    %v404 = vshrl.u32 %v395, 16
    %v406 = vrot.slane %v404, 7
    %v407 = vshll.u32 %v395, 16
    %v409 = vor.u32 %v406, %v407
    %v412 = vsel %vm105, 0, %v402
    %v413 = vsel %vm105, 0, %v409
    %v414 = vrot.slane %v400, 1
    %v415 = vor.u32 %v397, %v414
    %v416 = vrot.slane %v407, 1
    %v417 = vor.u32 %v404, %v416
    %v420 = vsel %vm116, %v415, 0
    %v421 = vsel %vm116, %v417, 0
    %v424 = vld [vmem:[#allocation7] sm:$0xf]
    %v425 = vld [vmem:[#allocation7 + $0x4] sm:$0xf]
    %v426 = vld [vmem:[#allocation7 + $0x8] sm:$0xf]
    %v427 = vld [vmem:[#allocation7 + $0xc] sm:$0xf]
    %v428 = vld [vmem:[#allocation7 + $0x10] sm:$0xf]
    %v429 = vld [vmem:[#allocation7 + $0x14] sm:$0xf]
    %v430 = vld [vmem:[#allocation7 + $0x18] sm:$0xf]
    %v431 = vld [vmem:[#allocation7 + $0x1c] sm:$0xf]
    %v432 = vld [vmem:[#allocation7 + $0x20] sm:$0xf]
    %v433 = vld [vmem:[#allocation7 + $0x24] sm:$0xf]
    %v434 = vld [vmem:[#allocation7 + $0x28] sm:$0xf]
    %v435 = vld [vmem:[#allocation7 + $0x2c] sm:$0xf]
    %v436 = vld [vmem:[#allocation7 + $0x30] sm:$0xf]
    %v437 = vld [vmem:[#allocation7 + $0x34] sm:$0xf]
    %v438 = vld [vmem:[#allocation7 + $0x38] sm:$0xf]
    %v439 = vld [vmem:[#allocation7 + $0x3c] sm:$0xf]
    %v440 = vld [vmem:[#allocation7 + $0x40] sm:$0xf]
    %v441 = vld [vmem:[#allocation7 + $0x44] sm:$0xf]
    %v442 = vld [vmem:[#allocation7 + $0x48] sm:$0xf]
    %v443 = vld [vmem:[#allocation7 + $0x4c] sm:$0xf]
    %v444 = vld [vmem:[#allocation7 + $0x50] sm:$0xf]
    %v445 = vld [vmem:[#allocation7 + $0x54] sm:$0xf]
    %v446 = vld [vmem:[#allocation7 + $0x58] sm:$0xf]
    %v447 = vld [vmem:[#allocation7 + $0x5c] sm:$0xf]
    %v448 = vld [vmem:[#allocation7 + $0x60] sm:$0xf]
    %v449 = vld [vmem:[#allocation7 + $0x64] sm:$0xf]
    %v450 = vld [vmem:[#allocation7 + $0x68] sm:$0xf]
    %v451 = vld [vmem:[#allocation7 + $0x6c] sm:$0xf]
    %v452 = vld [vmem:[#allocation7 + $0x70] sm:$0xf]
    %v453 = vld [vmem:[#allocation7 + $0x74] sm:$0xf]
    %v454 = vld [vmem:[#allocation7 + $0x78] sm:$0xf]
    %v455 = vld [vmem:[#allocation7 + $0x7c] sm:$0xf]
    %v456 = vld [vmem:[#allocation7 + $0x80] sm:$0xf]
    %v457 = vld [vmem:[#allocation7 + $0x84] sm:$0xf]
    %v458 = vld [vmem:[#allocation7 + $0x88] sm:$0xf]
    %v459 = vld [vmem:[#allocation7 + $0x8c] sm:$0xf]
    %v460 = vld [vmem:[#allocation7 + $0x90] sm:$0xf]
    %v461 = vld [vmem:[#allocation7 + $0x94] sm:$0xf]
    %v462 = vld [vmem:[#allocation7 + $0x98] sm:$0xf]
    %v463 = vld [vmem:[#allocation7 + $0x9c] sm:$0xf]
    %v464 = vld [vmem:[#allocation7 + $0xa0] sm:$0xf]
    %v465 = vld [vmem:[#allocation7 + $0xa4] sm:$0xf]
    %v466 = vld [vmem:[#allocation7 + $0xa8] sm:$0xf]
    %v467 = vld [vmem:[#allocation7 + $0xac] sm:$0xf]
    %v468 = vld [vmem:[#allocation7 + $0xb0] sm:$0xf]
    %v469 = vld [vmem:[#allocation7 + $0xb4] sm:$0xf]
    %v470 = vld [vmem:[#allocation7 + $0xb8] sm:$0xf]
    %v471 = vld [vmem:[#allocation7 + $0xbc] sm:$0xf]
    %v472 = vld [vmem:[%s4] sm:$0x1]
    %v474 = vperm.slane %v472, 0
    %v524 = vunpack.c.l.b16 %v424
    %v525 = vunpack.c.l.b16 %v425
    %v526 = vunpack.c.l.b16 %v426
    %v527 = vunpack.c.l.b16 %v427
    %v528 = vunpack.c.l.b16 %v428
    %v529 = vunpack.c.l.b16 %v429
    %v530 = vunpack.c.l.b16 %v430
    %v531 = vunpack.c.l.b16 %v431
    %v532 = vunpack.c.l.b16 %v432
    %v533 = vunpack.c.l.b16 %v433
    %v534 = vunpack.c.l.b16 %v434
    %v535 = vunpack.c.l.b16 %v435
    %v536 = vunpack.c.l.b16 %v436
    %v537 = vunpack.c.l.b16 %v437
    %v538 = vunpack.c.l.b16 %v438
    %v539 = vunpack.c.l.b16 %v439
    %v540 = vunpack.c.l.b16 %v440
    %v541 = vunpack.c.l.b16 %v441
    %v542 = vunpack.c.l.b16 %v442
    %v543 = vunpack.c.l.b16 %v443
    %v544 = vunpack.c.l.b16 %v444
    %v545 = vunpack.c.l.b16 %v445
    %v546 = vunpack.c.l.b16 %v446
    %v547 = vunpack.c.l.b16 %v447
    %v548 = vunpack.c.l.b16 %v448
    %v549 = vunpack.c.l.b16 %v449
    %v550 = vunpack.c.l.b16 %v450
    %v551 = vunpack.c.l.b16 %v451
    %v552 = vunpack.c.l.b16 %v452
    %v553 = vunpack.c.l.b16 %v453
    %v554 = vunpack.c.l.b16 %v454
    %v555 = vunpack.c.l.b16 %v455
    %v556 = vunpack.c.l.b16 %v456
    %v557 = vunpack.c.l.b16 %v457
    %v558 = vunpack.c.l.b16 %v458
    %v559 = vunpack.c.l.b16 %v459
    %v560 = vunpack.c.l.b16 %v460
    %v561 = vunpack.c.l.b16 %v461
    %v562 = vunpack.c.l.b16 %v462
    %v563 = vunpack.c.l.b16 %v463
    %v564 = vunpack.c.l.b16 %v464
    %v565 = vunpack.c.l.b16 %v465
    %v566 = vunpack.c.l.b16 %v466
    %v567 = vunpack.c.l.b16 %v467
    %v568 = vunpack.c.l.b16 %v468
    %v569 = vunpack.c.l.b16 %v469
    %v570 = vunpack.c.l.b16 %v470
    %v571 = vunpack.c.l.b16 %v471
    %v572 = vpack.c.b16 %v525, %v524
    %v573 = vpack.c.b16 %v527, %v526
    %v574 = vpack.c.b16 %v529, %v528
    %v575 = vpack.c.b16 %v531, %v530
    %v576 = vpack.c.b16 %v533, %v532
    %v577 = vpack.c.b16 %v535, %v534
    %v578 = vpack.c.b16 %v537, %v536
    %v579 = vpack.c.b16 %v539, %v538
    %v580 = vpack.c.b16 %v541, %v540
    %v581 = vpack.c.b16 %v543, %v542
    %v582 = vpack.c.b16 %v545, %v544
    %v583 = vpack.c.b16 %v547, %v546
    %v584 = vpack.c.b16 %v549, %v548
    %v585 = vpack.c.b16 %v551, %v550
    %v586 = vpack.c.b16 %v553, %v552
    %v587 = vpack.c.b16 %v555, %v554
    %v588 = vpack.c.b16 %v557, %v556
    %v589 = vpack.c.b16 %v559, %v558
    %v590 = vpack.c.b16 %v561, %v560
    %v591 = vpack.c.b16 %v563, %v562
    %v592 = vpack.c.b16 %v565, %v564
    %v593 = vpack.c.b16 %v567, %v566
    %v594 = vpack.c.b16 %v569, %v568
    %v595 = vpack.c.b16 %v571, %v570
    %620 = vmatpush.bf16.msra.mxu0 %v579
    %621 = vmatpush.bf16.msra.mxu0 %v578
    %622 = vmatpush.bf16.msra.mxu0 %v577
    %623 = vmatpush.bf16.msra.mxu0 %v576
    %624 = vmatpush.bf16.msra.mxu0 %v575
    %625 = vmatpush.bf16.msra.mxu0 %v574
    %626 = vmatpush.bf16.msra.mxu0 %v573
    %627 = vmatpush.bf16.msra.mxu0 %v572
    %628 = vmatmul.bf16.gmra.mxu0 %v412
    %v629 = vpop.f32.mrf.mxu0
    %v630 = vadd.f32 %v474, %v629
    %v631 = vpop.f32.mrf.mxu0
    %v632 = vadd.f32 %v474, %v631
    %633 = vmatmul.bf16.gmra.mxu0 %v413
    %v634 = vpop.f32.mrf.mxu0
    %v635 = vadd.f32 %v474, %v634
    %v636 = vpop.f32.mrf.mxu0
    %v637 = vadd.f32 %v474, %v636
    %638 = vdwg.mxu0
    %639 = vmatpush.bf16.msra.mxu0 %v587
    %640 = vmatpush.bf16.msra.mxu0 %v586
    %641 = vmatpush.bf16.msra.mxu0 %v585
    %642 = vmatpush.bf16.msra.mxu0 %v584
    %643 = vmatpush.bf16.msra.mxu0 %v583
    %644 = vmatpush.bf16.msra.mxu0 %v582
    %645 = vmatpush.bf16.msra.mxu0 %v581
    %646 = vmatpush.bf16.msra.mxu0 %v580
    %647 = vmatmul.bf16.gmra.mxu0 %v394
    %v648 = vpop.f32.mrf.mxu0
    %v649 = vadd.f32 %v630, %v648
    %v650 = vpop.f32.mrf.mxu0
    %v651 = vadd.f32 %v632, %v650
    %652 = vmatmul.bf16.gmra.mxu0 %v395
    %v653 = vpop.f32.mrf.mxu0
    %v654 = vadd.f32 %v635, %v653
    %v655 = vpop.f32.mrf.mxu0
    %v656 = vadd.f32 %v637, %v655
    %657 = vdwg.mxu0
    %658 = vmatpush.bf16.msra.mxu0 %v595
    %659 = vmatpush.bf16.msra.mxu0 %v594
    %660 = vmatpush.bf16.msra.mxu0 %v593
    %661 = vmatpush.bf16.msra.mxu0 %v592
    %662 = vmatpush.bf16.msra.mxu0 %v591
    %663 = vmatpush.bf16.msra.mxu0 %v590
    %664 = vmatpush.bf16.msra.mxu0 %v589
    %665 = vmatpush.bf16.msra.mxu0 %v588
    %666 = vmatmul.bf16.gmra.mxu0 %v420
    %v667 = vpop.f32.mrf.mxu0
    %v668 = vadd.f32 %v649, %v667
    %v669 = vpop.f32.mrf.mxu0
    %v670 = vadd.f32 %v651, %v669
    %671 = vmatmul.bf16.gmra.mxu0 %v421
    %v672 = vpop.f32.mrf.mxu0
    %v673 = vadd.f32 %v654, %v672
    %v674 = vpop.f32.mrf.mxu0
    %v675 = vadd.f32 %v656, %v674
    %676 = vdwg.mxu0
    %v677 = vadd.f32 %v668, %v69
    %v678 = vadd.f32 %v670, %v70
    %v679 = vadd.f32 %v673, %v71
    %v680 = vadd.f32 %v675, %v72
    %681 = vst [vmem:[#allocation8] sm:$0xff] %v677
    %682 = vst [vmem:[#allocation8 + $0x8] sm:$0xff] %v678
    %683 = vst [vmem:[#allocation8 + $0x10] sm:$0xff] %v679
    %684 = vst [vmem:[#allocation8 + $0x18] sm:$0xff] %v680
    // Predicated region
    $region34: #{tpu_custom_call.1} parent=1 // pred_check
      _
    $region35: #{tpu_custom_call.1} parent=1 // pred_check_branch
      %686 = sbr.rel (0) target = $region37
    $region36: #{tpu_custom_call.1} parent=1 // pred_region
      %688 = vsyncadd [#allocation4], 0
      %s689 = sshll.u32 [#allocation8], 4
      %s690 = int_to_ptr.vmem [resolvable:$true] %s689
      %s691 = sshll.u32 %s5, 4
      %s692 = int_to_ptr.hbm [resolvable:$true] %s691
      %697 = dma.vmem_to_hbm [thread:$0]  %s690, 512, %s692, [#allocation4], 128, 128, 8
    $region37: #{tpu_custom_call.1} parent=1 // pred_fallthru
      _
    // Predicated region
    $region38: #{tpu_custom_call.1} parent=1 // pred_check
      _
    $region39: #{tpu_custom_call.1} parent=1 // pred_check_branch
      %699 = sbr.rel (0) target = $region41
    $region40: #{tpu_custom_call.1} parent=1 // pred_region
      %701 = dma.done [#allocation4], 512
    $region41: #{tpu_custom_call.1} parent=1 // pred_fallthru
      _
    %702 = vsyncpa [#allocation3], 1
    %703 = vsyncpa [#allocation6], 1
    %704 = vsyncpa [#allocation4], 1

</llo_original>
